<compile_context>
chip_gen: v5e
topology: v5e:2x2
jax: 0.10.0
libtpu: 0.0.40
codegen_flags: <defaults>
</compile_context>

<pallas_src>
import jax
import jax.numpy as jnp
from jax.experimental import pallas as pl
from jax.experimental.pallas import tpu as pltpu


def _round_up(x, m):
    return (x + m - 1) // m * m


def _vmem_capacity_bytes(default=64 << 20):
    """Per-generation VMEM capacity (v5e/v6e: 128 MiB, v7x: 64 MiB per TC)."""
    try:
        cap = getattr(pltpu.get_tpu_info(), "vmem_capacity_bytes", None)
        return int(cap) if cap else default
    except Exception:
        return default


def _cartpred_kernel(x_ref, w1_ref, b1_ref, w2_ref, b2_ref, out_ref):
    # fc1: MXU matmul with f32 accumulation; bias + ReLU epilogue stays f32
    # (v5e's VPU/EUP have no bf16 path).
    h = jnp.dot(x_ref[...], w1_ref[...], preferred_element_type=jnp.float32)
    h = jnp.maximum(h + b1_ref[...], 0.0)            # (TB, L) + (1, L) broadcast
    # fc2: cast h to the weight dtype (no-op in f32 mode, bf16 for the MXU in
    # bf16 mode), accumulate in f32, fused policy|value output block.
    out = jnp.dot(h.astype(w2_ref.dtype), w2_ref[...],
                  preferred_element_type=jnp.float32)
    out_ref[...] = (out + b2_ref[...]).astype(out_ref.dtype)


def _build_call(Bp, tb, L, out_dim, out_dtype, vmem_limit, use_pipeline_modes):
    def spec(shape, index_map, buffers):
        if use_pipeline_modes and buffers is not None:
            return pl.BlockSpec(shape, index_map,
                                pipeline_mode=pl.Buffered(buffers))
        return pl.BlockSpec(shape, index_map)

    return pl.pallas_call(
        _cartpred_kernel,
        out_shape=jax.ShapeDtypeStruct((Bp, out_dim), out_dtype),
        grid_spec=pltpu.PrefetchScalarGridSpec(
            num_scalar_prefetch=0,
            grid=(Bp // tb,),
            in_specs=[
                # Streamed latent tile: 3-deep buffering (per-step compute is
                # much shorter than the tile DMA).
                spec((tb, L), lambda i: (i, 0), 3),
                # Constant index_maps -> DMA'd once, VMEM-resident; single
                # buffer is enough.
                spec((L, L), lambda i: (0, 0), 1),        # w1
                spec((1, L), lambda i: (0, 0), 1),        # b1
                spec((L, out_dim), lambda i: (0, 0), 1),  # w2
                spec((1, out_dim), lambda i: (0, 0), 1),  # b2
            ],
            out_specs=spec((tb, out_dim), lambda i: (i, 0), 3),
        ),
        compiler_params=pltpu.CompilerParams(
            dimension_semantics=("parallel",),   # megacore split on v7x
            vmem_limit_bytes=vmem_limit,
        ),
    )


def cartpred_forward(latent, params, *, action_size, full_width,
                     block_b=1024, matmul_dtype=None):
    """latent: (B, latent_size).  params: fc1/fc2 weights stored in (in, out)
    layout (i.e. PyTorch W^T) plus 1-D biases.  Returns (policy, value) logits.
    matmul_dtype=jnp.bfloat16 optionally casts matmul operands (f32 accumulate,
    f32 epilogue, f32 output)."""
    B, L = latent.shape
    out_dim = action_size + full_width
    out_dtype = latent.dtype

    w1 = params["w1"]                                   # (L, L)
    b1 = params["b1"].reshape(1, L).astype(jnp.float32)
    w2 = params["w2"]                                   # (L, out_dim)
    b2 = params["b2"].reshape(1, out_dim).astype(jnp.float32)

    if matmul_dtype is not None:
        latent = latent.astype(matmul_dtype)
        w1 = w1.astype(matmul_dtype)
        w2 = w2.astype(matmul_dtype)

    # --- batch tiling --------------------------------------------------------
    # >=2 tiles whenever there is enough work so the "parallel" batch axis
    # engages both v7x TensorCores; tb sized so the last tile pads <8 rows.
    n_tiles = pl.cdiv(B, block_b)
    if n_tiles == 1 and B >= 16:
        n_tiles = 2
    tb = _round_up(pl.cdiv(B, n_tiles), 8)
    n_tiles = pl.cdiv(B, tb)
    Bp = n_tiles * tb
    if Bp != B:
        latent = jnp.pad(latent, ((0, Bp - B), (0, 0)))

    # --- per-generation VMEM budget ------------------------------------------
    # Account for lane padding of the in-VMEM tiles (last dim padded to 128).
    in_bytes = jnp.dtype(latent.dtype).itemsize
    w_bytes = jnp.dtype(w1.dtype).itemsize
    L_vmem = _round_up(L, 128)
    out_vmem = _round_up(out_dim, 128)
    est = (3 * tb * L_vmem * in_bytes            # latent tiles (3-deep)
           + 3 * tb * out_vmem * 4               # output tiles (3-deep, f32)
           + 2 * L * (L_vmem + out_vmem) * w_bytes   # weights (<=2 buffers)
           + 4 * 8 * 128 * 4)                        # biases (tile-padded)
    vmem_cap = _vmem_capacity_bytes()
    vmem_limit = int(min(max(2 * est, 32 << 20), int(0.8 * vmem_cap)))

    args = (latent, w1, b1, w2, b2)
    try:
        out = _build_call(Bp, tb, L, out_dim, out_dtype,
                          vmem_limit, True)(*args)
    except Exception:
        # Graceful fallback if this JAX build rejects pipeline_mode=pl.Buffered
        # on top-level BlockSpecs; genuine kernel errors re-raise here too.
        out = _build_call(Bp, tb, L, out_dim, out_dtype,
                          vmem_limit, False)(*args)

    # Policy/value split as two direct slices of the fused, batch-padded output.
    return out[:B, :action_size], out[:B, action_size:]


def init_params(key, latent_size, action_size, full_width):
    """Deterministic synthetic init (PyTorch-Linear-like uniform bounds),
    stored directly in (in, out) layout (equivalent to PyTorch W^T)."""
    k1, k2, k3, k4 = jax.random.split(key, 4)
    out_dim = action_size + full_width
    bound = 1.0 / jnp.sqrt(latent_size)
    w1 = jax.random.uniform(k1, (latent_size, latent_size), jnp.float32, -bound, bound)
    b1 = jax.random.uniform(k2, (latent_size,), jnp.float32, -bound, bound)
    w2 = jax.random.uniform(k3, (latent_size, out_dim), jnp.float32, -bound, bound)
    b2 = jax.random.uniform(k4, (out_dim,), jnp.float32, -bound, bound)
    return {"w1": w1, "b1": b1, "w2": w2, "b2": b2}


if __name__ == "__main__":
    # Small shapes consistent with the module (CartPole-ish sizes).
    action_size = 4
    latent_size = 32
    support_width = 5
    full_width = support_width * 2 + 1       # 11 -> out_dim = 15
    batch = 2

    key = jax.random.PRNGKey(0)
    k_param, k_in, k_in2 = jax.random.split(key, 3)
    params = init_params(k_param, latent_size, action_size, full_width)
    latent = jax.random.normal(k_in, (batch, latent_size), jnp.float32)

    def reference(x):
        h = jnp.maximum(x @ params["w1"] + params["b1"], 0.0)
        return h @ params["w2"] + params["b2"]

    # 1) Exact-f32 path, tiny batch (single-tile grid).
    policy_logits, value_logits = cartpred_forward(
        latent, params, action_size=action_size, full_width=full_width)
    jax.block_until_ready((policy_logits, value_logits))
    ref = reference(latent)
    assert policy_logits.shape == (batch, action_size)
    assert value_logits.shape == (batch, full_width)
    assert jnp.allclose(policy_logits, ref[:, :action_size], atol=1e-5)
    assert jnp.allclose(value_logits, ref[:, action_size:], atol=1e-5)

    # 2) Multi-tile grid + batch-padding path (exercises megacore split and
    #    "pad < 8 rows" tiling), still exact f32.
    batch2 = 50
    latent2 = jax.random.normal(k_in2, (batch2, latent_size), jnp.float32)
    p2, v2 = cartpred_forward(latent2, params, action_size=action_size,
                              full_width=full_width, block_b=16)
    jax.block_until_ready((p2, v2))
    ref2 = reference(latent2)
    assert jnp.allclose(p2, ref2[:, :action_size], atol=1e-5)
    assert jnp.allclose(v2, ref2[:, action_size:], atol=1e-5)

    # 3) bf16-operand perf mode (f32 accumulation/epilogue), relaxed tolerance.
    p3, v3 = cartpred_forward(latent2, params, action_size=action_size,
                              full_width=full_width, block_b=16,
                              matmul_dtype=jnp.bfloat16)
    jax.block_until_ready((p3, v3))
    assert jnp.allclose(p3, ref2[:, :action_size], atol=5e-2, rtol=5e-2)
    assert jnp.allclose(v3, ref2[:, action_size:], atol=5e-2, rtol=5e-2)

    print("KERNEL_OK")
</pallas_src>

<mosaic_0001>
module attributes {stable_mosaic.version = 11 : i64} {
  func.func @_cartpred_kernel(%arg0: i32, %arg1: memref<8x32xf32, #tpu.memory_space<vmem>>, %arg2: memref<32x32xf32, #tpu.memory_space<vmem>>, %arg3: memref<1x32xf32, #tpu.memory_space<vmem>>, %arg4: memref<32x15xf32, #tpu.memory_space<vmem>>, %arg5: memref<1x15xf32, #tpu.memory_space<vmem>>, %arg6: memref<8x15xf32, #tpu.memory_space<vmem>>) attributes {dimension_semantics = [#tpu.dimension_semantics<parallel>], iteration_bounds = array<i64: 1>, scalar_prefetch = 0 : i64, scratch_operands = 0 : i64, tpu.core_type = #tpu.core_type<tc>, window_params = [{transform_indices = @transform_0, window_bounds = array<i64: 8, 32>}, {pipeline_mode = #tpu.pipeline_mode<synchronous>, transform_indices = @transform_1, window_bounds = array<i64: 32, 32>}, {pipeline_mode = #tpu.pipeline_mode<synchronous>, transform_indices = @transform_2, window_bounds = array<i64: 1, 32>}, {pipeline_mode = #tpu.pipeline_mode<synchronous>, transform_indices = @transform_3, window_bounds = array<i64: 32, 15>}, {pipeline_mode = #tpu.pipeline_mode<synchronous>, transform_indices = @transform_4, window_bounds = array<i64: 1, 15>}, {transform_indices = @transform_5, window_bounds = array<i64: 8, 15>}]} {
    %c0 = arith.constant 0 : index
    %c0_0 = arith.constant 0 : index
    %0 = vector.load %arg1[%c0, %c0_0] : memref<8x32xf32, #tpu.memory_space<vmem>>, vector<8x32xf32>
    %c0_1 = arith.constant 0 : index
    %c0_2 = arith.constant 0 : index
    %1 = vector.load %arg2[%c0_1, %c0_2] : memref<32x32xf32, #tpu.memory_space<vmem>>, vector<32x32xf32>
    %cst = arith.constant dense<0.000000e+00> : vector<8x32xf32>
    %2 = tpu.matmul %0, %1, %cst {dimension_numbers = #tpu.dot_dimension_numbers<[1], [0], [0], [1], [0, 0, 1, 1], [], []>} : vector<8x32xf32>, vector<32x32xf32>, vector<8x32xf32> -> vector<8x32xf32>
    %c0_3 = arith.constant 0 : index
    %c0_4 = arith.constant 0 : index
    %3 = vector.load %arg3[%c0_3, %c0_4] : memref<1x32xf32, #tpu.memory_space<vmem>>, vector<1x32xf32>
    %4 = vector.broadcast %3 : vector<1x32xf32> to vector<8x32xf32>
    %5 = arith.addf %2, %4 : vector<8x32xf32>
    %cst_5 = arith.constant 0.000000e+00 : f32
    %6 = vector.broadcast %cst_5 : f32 to vector<8x32xf32>
    %7 = arith.maximumf %5, %6 : vector<8x32xf32>
    %c0_6 = arith.constant 0 : index
    %c0_7 = arith.constant 0 : index
    %8 = vector.load %arg4[%c0_6, %c0_7] : memref<32x15xf32, #tpu.memory_space<vmem>>, vector<32x15xf32>
    %cst_8 = arith.constant dense<0.000000e+00> : vector<8x15xf32>
    %9 = tpu.matmul %7, %8, %cst_8 {dimension_numbers = #tpu.dot_dimension_numbers<[1], [0], [0], [1], [0, 0, 1, 1], [], []>} : vector<8x32xf32>, vector<32x15xf32>, vector<8x15xf32> -> vector<8x15xf32>
    %c0_9 = arith.constant 0 : index
    %c0_10 = arith.constant 0 : index
    %10 = vector.load %arg5[%c0_9, %c0_10] : memref<1x15xf32, #tpu.memory_space<vmem>>, vector<1x15xf32>
    %11 = vector.broadcast %10 : vector<1x15xf32> to vector<8x15xf32>
    %12 = arith.addf %9, %11 : vector<8x15xf32>
    %c0_11 = arith.constant 0 : index
    %c0_12 = arith.constant 0 : index
    %13 = vector.load %arg6[%c0_11, %c0_12] : memref<8x15xf32, #tpu.memory_space<vmem>>, vector<8x15xf32>
    tpu.vector_store %arg6[%c0_11, %c0_12], %12 {strides = array<i32>} : memref<8x15xf32, #tpu.memory_space<vmem>>, vector<8x15xf32>,
    return
  }
  func.func @transform_0(%arg0: i32) -> (i32, i32) {
    %c0_i32 = arith.constant 0 : i32
    %c0_i32_0 = arith.constant 0 : i32
    return %arg0, %c0_i32 : i32, i32
  }
  func.func @transform_1(%arg0: i32) -> (i32, i32) {
    %c0_i32 = arith.constant 0 : i32
    %c0_i32_0 = arith.constant 0 : i32
    %c0_i32_1 = arith.constant 0 : i32
    return %c0_i32, %c0_i32_0 : i32, i32
  }
  func.func @transform_2(%arg0: i32) -> (i32, i32) {
    %c0_i32 = arith.constant 0 : i32
    %c0_i32_0 = arith.constant 0 : i32
    %c0_i32_1 = arith.constant 0 : i32
    return %c0_i32, %c0_i32_0 : i32, i32
  }
  func.func @transform_3(%arg0: i32) -> (i32, i32) {
    %c0_i32 = arith.constant 0 : i32
    %c0_i32_0 = arith.constant 0 : i32
    %c0_i32_1 = arith.constant 0 : i32
    return %c0_i32, %c0_i32_0 : i32, i32
  }
  func.func @transform_4(%arg0: i32) -> (i32, i32) {
    %c0_i32 = arith.constant 0 : i32
    %c0_i32_0 = arith.constant 0 : i32
    %c0_i32_1 = arith.constant 0 : i32
    return %c0_i32, %c0_i32_0 : i32, i32
  }
  func.func @transform_5(%arg0: i32) -> (i32, i32) {
    %c0_i32 = arith.constant 0 : i32
    %c0_i32_0 = arith.constant 0 : i32
    return %arg0, %c0_i32 : i32, i32
  }
}

</mosaic_0001>

<llo_original>
// kernel: tpu_custom_call.1
$region0: #{tpu_custom_call.1}
  #allocation0 [shape = 'u32[]', space=smem, size = 0x4, offset = 0x4, fixed_abs, tag = 'smem constant byte address 0x4 - core index']
  #allocation1 [shape = 'u32[72,128]{1,0:T(1,128)}', space=vmem, size = 0x9000, scoped, tag = 'internal scratch']
  %s0 = inlined_call_operand.vmem [shape: f32[8,32], index: 0, kind: input, shape index: {}]
  %s1 = inlined_call_operand.vmem [shape: f32[32,32], index: 1, kind: input, shape index: {}]
  %s2 = inlined_call_operand.vmem [shape: f32[1,32], index: 2, kind: input, shape index: {}]
  %s3 = inlined_call_operand.vmem [shape: f32[32,15], index: 3, kind: input, shape index: {}]
  %s4 = inlined_call_operand.vmem [shape: f32[1,15], index: 4, kind: input, shape index: {}]
  %s5 = inlined_call_operand.hbm [shape: f32[8,15], index: 5, kind: output, shape index: {}]
  %s6 = sld [smem:[#allocation0]]
  $region30: #{tpu_custom_call.1} parent=0
    _
  %s8 = ssub.s32 1, %s6
  %s9 = scalar_select 0, %s8, %s6
  $region1: #{tpu_custom_call.1} parent=0
    #allocation2 [shape = 'u8[4096]{0}', space=vmem, size = 0x1000, scoped, tag = 'output window, operand 0, single buffered']
    #allocation3 [shape = 's32[1]{0}', space=sflag, size = 0x4, scoped, tag = 'scoped memory for tpu_custom_call.1']
    %10 = vsyncpa [#allocation3], 0
    // Predicated region
    $region2: #{tpu_custom_call.1} parent=1 // pred_check
      _
    $region3: #{tpu_custom_call.1} parent=1 // pred_check_branch
      %12 = sbr.rel (0) target = $region5
    $region4: #{tpu_custom_call.1} parent=1 // pred_region
      _
    $region5: #{tpu_custom_call.1} parent=1 // pred_fallthru
      _
    // Predicated region
    $region6: #{tpu_custom_call.1} parent=1 // pred_check
      _
    $region7: #{tpu_custom_call.1} parent=1 // pred_check_branch
      %14 = sbr.rel (0) target = $region9
    $region8: #{tpu_custom_call.1} parent=1 // pred_region
      _
    $region9: #{tpu_custom_call.1} parent=1 // pred_fallthru
      _
    // Predicated region
    $region10: #{tpu_custom_call.1} parent=1 // pred_check
      _
    $region11: #{tpu_custom_call.1} parent=1 // pred_check_branch
      %16 = sbr.rel (0) target = $region13
    $region12: #{tpu_custom_call.1} parent=1 // pred_region
      _
    $region13: #{tpu_custom_call.1} parent=1 // pred_fallthru
      _
    // Predicated region
    $region14: #{tpu_custom_call.1} parent=1 // pred_check
      _
    $region15: #{tpu_custom_call.1} parent=1 // pred_check_branch
      %18 = sbr.rel (0) target = $region17
    $region16: #{tpu_custom_call.1} parent=1 // pred_region
      _
    $region17: #{tpu_custom_call.1} parent=1 // pred_fallthru
      _
    // Predicated region
    $region18: #{tpu_custom_call.1} parent=1 // pred_check
      _
    $region19: #{tpu_custom_call.1} parent=1 // pred_check_branch
      %20 = sbr.rel (0) target = $region21
    $region20: #{tpu_custom_call.1} parent=1 // pred_region
      _
    $region21: #{tpu_custom_call.1} parent=1 // pred_fallthru
      _
    %v21 = vld [vmem:[%s0] sm:$0xff]
    %v22 = vld [vmem:[%s1] sm:$0xff]
    %v23 = vld [vmem:[%s1 + $0x8] sm:$0xff]
    %v24 = vld [vmem:[%s1 + $0x10] sm:$0xff]
    %v25 = vld [vmem:[%s1 + $0x18] sm:$0xff]
    %v26 = vld [vmem:[%s2] sm:$0x1]
    %v28 = vperm.slane %v26, 0
    %vm30 = vcmask 261120
    %v32 = vsel %vm30, %v21, 0
    %34 = vmatpush.msra.mxu0 0.0
    %35 = vmatpush.msra.mxu0 0.0
    %36 = vmatpush.msra.mxu0 0.0
    %37 = vmatpush.msra.mxu0 0.0
    %38 = vmatpush.msra.mxu0 0.0
    %39 = vmatpush.msra.mxu0 0.0
    %40 = vmatpush.msra.mxu0 0.0
    %41 = vmatpush.msra.mxu0 0.0
    %42 = vmatpush.msra.mxu0 0.0
    %43 = vmatpush.msra.mxu0 0.0
    %44 = vmatpush.msra.mxu0 0.0
    %45 = vmatpush.msra.mxu0 0.0
    %46 = vmatpush.msra.mxu0 %v25
    %47 = vmatpush.msra.mxu0 %v24
    %48 = vmatpush.msra.mxu0 %v23
    %49 = vmatpush.msra.mxu0 %v22
    %50 = vmatmul.f32.gmra.mxu0 %v32
    %v51 = vpop.f32.mrf.mxu0
    %v52 = vadd.f32 %v28, %v51
    %53 = vdwg.mxu0
    %v54 = vmax.f32 %v52, 0.0
    %v55 = vld [vmem:[%s3] sm:$0xff]
    %v56 = vld [vmem:[%s3 + $0x8] sm:$0xff]
    %v57 = vld [vmem:[%s3 + $0x10] sm:$0xff]
    %v58 = vld [vmem:[%s3 + $0x18] sm:$0xff]
    %v59 = vld [vmem:[%s4] sm:$0x1]
    %v61 = vperm.slane %v59, 0
    %v64 = vsel %vm30, %v54, 0
    %66 = vmatpush.msra.mxu0 0.0
    %67 = vmatpush.msra.mxu0 0.0
    %68 = vmatpush.msra.mxu0 0.0
    %69 = vmatpush.msra.mxu0 0.0
    %70 = vmatpush.msra.mxu0 0.0
    %71 = vmatpush.msra.mxu0 0.0
    %72 = vmatpush.msra.mxu0 0.0
    %73 = vmatpush.msra.mxu0 0.0
    %74 = vmatpush.msra.mxu0 0.0
    %75 = vmatpush.msra.mxu0 0.0
    %76 = vmatpush.msra.mxu0 0.0
    %77 = vmatpush.msra.mxu0 0.0
    %78 = vmatpush.msra.mxu0 %v58
    %79 = vmatpush.msra.mxu0 %v57
    %80 = vmatpush.msra.mxu0 %v56
    %81 = vmatpush.msra.mxu0 %v55
    %82 = vmatmul.f32.gmra.mxu0 %v64
    %v83 = vpop.f32.mrf.mxu0
    %v84 = vadd.f32 %v61, %v83
    %85 = vdwg.mxu0
    %vm86 = vcmask 121856
    %87 = vst.msk [vmem:[#allocation2] sm:$0xff] %vm86, %v84
    // Predicated region
    $region22: #{tpu_custom_call.1} parent=1 // pred_check
      _
    $region23: #{tpu_custom_call.1} parent=1 // pred_check_branch
      %89 = sbr.rel (0) target = $region25
    $region24: #{tpu_custom_call.1} parent=1 // pred_region
      %91 = vsyncadd [#allocation3], 0
      %s93 = sshll.u32 [#allocation2], 4
      %s94 = int_to_ptr.vmem [resolvable:$true] %s93
      %s95 = sshll.u32 %s5, 4
      %s96 = int_to_ptr.hbm [resolvable:$true] %s95
      %98 = dma.vmem_to_hbm [thread:$0]  %s94, 128, %s96, [#allocation3]
    $region25: #{tpu_custom_call.1} parent=1 // pred_fallthru
      _
    // Predicated region
    $region26: #{tpu_custom_call.1} parent=1 // pred_check
      _
    $region27: #{tpu_custom_call.1} parent=1 // pred_check_branch
      %100 = sbr.rel (0) target = $region29
    $region28: #{tpu_custom_call.1} parent=1 // pred_region
      %102 = dma.done [#allocation3], 128
    $region29: #{tpu_custom_call.1} parent=1 // pred_fallthru
      _
    %103 = vsyncpa [#allocation3], 1

</llo_original>
